<compile_context>
chip_gen: v7x
topology: tpu7x:2x2x1
jax: 0.10.0
libtpu: 0.0.40
codegen_flags: <defaults>
</compile_context>

<pallas_src>
import numpy as np
import jax
import jax.numpy as jnp
from jax.experimental import pallas as pl
from jax.experimental.pallas import tpu as pltpu


# ----------------------------------------------------------------------------
# Fused kernel:
#   adj     = sigmoid(node1 @ node1.T)                            (MXU, f32)
#   mask[b] = (logits > 0) & (row < counts[b]) & (col < counts[b])  (int8)
# ----------------------------------------------------------------------------
def _fused_adj_edge_kernel(counts_ref, node_ref, adj_ref, mask_ref):
    i = pl.program_id(0)
    j = pl.program_id(1)
    tm, tn = adj_ref.shape

    r0 = pl.multiple_of(i * tm, tm)
    c0 = pl.multiple_of(j * tn, tn)
    a = node_ref[pl.ds(r0, tm), :]                       # (tm, D) rows i
    b = node_ref[pl.ds(c0, tn), :]                       # (tn, D) rows j

    # (tm, D) x (tn, D)^T -> (tm, tn) logits on the MXU, f32 accumulation.
    logits = jax.lax.dot_general(
        a, b, (((1,), (1,)), ((), ())),
        preferred_element_type=jnp.float32)

    adj_ref[...] = jax.nn.sigmoid(logits)

    # sigmoid is monotone and sigmoid(0) == 0.5, so (sigmoid(x) > 0.5) == (x > 0).
    # Thresholding the logits keeps the mask stores off the EUP (transcendental)
    # dependency chain.
    over = logits > 0.0

    # Narrow (tm,1)/(1,tn) iotas; the boolean compares broadcast instead of
    # materializing full int32 planes.
    row = i * tm + jax.lax.broadcasted_iota(jnp.int32, (tm, 1), 0)
    col = j * tn + jax.lax.broadcasted_iota(jnp.int32, (1, tn), 1)

    n_graphs = mask_ref.shape[0]
    keeps = []
    for g in range(n_graphs):                 # B is small & static -> unrolled
        e_n = counts_ref[g]                   # nodes in graph g (SMEM scalar)
        keeps.append(over & (row < e_n) & (col < e_n))
    # One lane-dense (B, tm, tn) int8 store instead of B separate store epilogues.
    mask_ref[...] = jnp.stack(keeps, axis=0).astype(jnp.int8)


# ----------------------------------------------------------------------------
# Tile selection: store-bandwidth / VMEM-budget driven (not MXU-shape driven).
# ----------------------------------------------------------------------------
def _divisors_desc(n, step):
    cands = [d for d in range(step, n + 1, step) if n % d == 0]
    return sorted(cands, reverse=True) or [n]


def _default_vmem_budget():
    # Conservative working-set budget that fits v7x's 32 MiB scoped-VMEM default
    # (64 MiB physical) while staying comfortably inside v5e/v6e's 128 MiB.
    try:
        cap = pltpu.get_tpu_info().vmem_capacity_bytes
    except Exception:
        cap = 64 * 1024 * 1024
    return min(cap // 2, 24 * 1024 * 1024)


def _pick_tiles(N, D, B, vmem_budget):
    resident = 2 * N * D * 4                      # node1 kept fully resident in VMEM
    budget = max(vmem_budget - resident, 1 << 20)

    # Widest lane-dense output tile first (unmasked vst bursts), then the largest
    # row tile (multiple of 32 -> legal int8 sublane tiling) fitting the budget.
    tn_cands = _divisors_desc(N, 128) if N % 128 == 0 else [N]
    tm_cands = _divisors_desc(N, 32) if N % 32 == 0 else [N]

    tm, tn = tm_cands[-1], tn_cands[-1]           # smallest legal fallback
    found = False
    for cand_tn in tn_cands:
        for cand_tm in tm_cands:
            # double-buffered adj (f32) + mask (B x int8) output blocks
            if 2 * cand_tm * cand_tn * (4 + B) <= budget:
                tm, tn = cand_tm, cand_tn
                found = True
                break
        if found:
            break

    # v7x megacore: if the grid would be (1, 1), split the row axis so both
    # TensorCores get a "parallel" grid step (no effect on v5e/v6e, 1 TC).
    if tm == N and tn == N and N % 64 == 0:
        tm = N // 2
    return tm, tn


def fused_adj_edges(node1, counts, *, vmem_budget=None):
    N, D = node1.shape
    B = counts.shape[0]
    if vmem_budget is None:
        vmem_budget = _default_vmem_budget()
    tm, tn = _pick_tiles(N, D, B, vmem_budget)
    assert N % tm == 0 and N % tn == 0
    grid = (N // tm, N // tn)
    return pl.pallas_call(
        _fused_adj_edge_kernel,
        out_shape=(jax.ShapeDtypeStruct((N, N), jnp.float32),
                   jax.ShapeDtypeStruct((B, N, N), jnp.int8)),
        grid=grid,
        in_specs=[
            pl.BlockSpec(memory_space=pltpu.MemorySpace.SMEM),   # counts (B,)
            pl.BlockSpec((N, D), lambda i, j: (0, 0)),           # node1, resident
        ],
        out_specs=(pl.BlockSpec((tm, tn), lambda i, j: (i, j)),
                   pl.BlockSpec((B, tm, tn), lambda i, j: (0, i, j))),
        compiler_params=pltpu.CompilerParams(
            dimension_semantics=("parallel", "parallel"),
            vmem_limit_bytes=32 * 1024 * 1024),
    )(counts, node1)


# ----------------------------------------------------------------------------
# Single jitted device-side forward: time embeddings + fused adjacency/mask.
# ----------------------------------------------------------------------------
@jax.jit
def _device_forward(node1, day_emb, week_emb, time, counts):
    time = time.reshape(-1, 2)
    day = jnp.take(day_emb, time[:, 0], axis=0)                 # (B, 10)
    week = jnp.take(week_emb, time[:, 1], axis=0)               # (B, 10)
    d_w = jnp.concatenate([day, week], axis=1)                  # (B, 20)
    # einsum('bld,bdc->blc') with l=c=1 == per-sample sum of squares
    time_values = jnp.sum(d_w * d_w, axis=1).astype(jnp.float32)
    adj, mask = fused_adj_edges(node1, counts)
    return adj, mask, time_values


# ----------------------------------------------------------------------------
# Forward glue (mirrors DynGraphWave.forward for is_pregraph=False, dynamic=True)
# ----------------------------------------------------------------------------
def dyn_graph_wave_forward(params, batch):
    node1 = params["node1"]
    N = node1.shape[0]

    ptr = jnp.asarray(batch["ptr"])
    counts = (ptr[1:] - ptr[:-1]).astype(jnp.int32)             # nodes per graph
    # No blocking host sync before dispatch: the sanity check happens after the
    # single device_get below.
    adj, mask, time_values = _device_forward(
        node1, params["day_emb"], params["week_emb"], batch["time"], counts)

    # Single device->host transfer of everything the ragged gather needs.
    adj_np, mask_np, tv_np, ptr_np = jax.device_get((adj, mask, time_values, ptr))
    counts_np = ptr_np[1:] - ptr_np[:-1]
    assert int(counts_np.max()) <= N, "graph larger than max_nodes adjacency"

    # Batched nonzero: lexicographic (b, r, c) order == per-graph row-major
    # torch.nonzero() order concatenated over graphs.
    b_idx, r, c = np.nonzero(mask_np)
    edge_index = np.stack([r, c]).astype(np.int64) + ptr_np[b_idx][None, :]  # (2, E)
    edge_attr = (adj_np[r, c] * tv_np[b_idx])[:, None].astype(np.float32)    # (E, 1)

    # TODO(synk): self.model (cons_graphwave.GraphWave / cons_agcrn.AGCRN) source
    # is not provided with this module, so the downstream spatio-temporal GNN on
    # batch.x is not implemented here.
    return adj, edge_index, edge_attr, mask


if __name__ == "__main__":
    key = jax.random.PRNGKey(0)
    k1, k2, k3, k4 = jax.random.split(key, 4)

    # cfg: max_nodes=128, node_embed=16, dynamic=True, is_pregraph=False
    N, D = 128, 16
    B = 2
    xavier_std = (2.0 / (N + D)) ** 0.5
    params = {
        "node1": jax.random.normal(k1, (N, D), jnp.float32) * xavier_std,
        "day_emb": jax.random.normal(k2, (24, 10), jnp.float32),
        "week_emb": jax.random.normal(k3, (7, 10), jnp.float32),
    }
    ptr = jnp.array([0, 100, 196], jnp.int32)                   # 2 graphs: 100 + 96 nodes
    batch = {
        "x": jax.random.normal(k4, (196, 12), jnp.float32),     # (total_nodes, 12), unused here
        "ptr": ptr,
        "time": jnp.array([[5, 1], [13, 4]], jnp.int32),        # (B, 2) hour-of-day, day-of-week
    }

    adj, edge_index, edge_attr, mask = dyn_graph_wave_forward(params, batch)
    jax.block_until_ready(adj)

    # ---- correctness check against a pure-JAX / numpy reference ----
    node1 = params["node1"]
    adj_ref = np.asarray(jax.nn.sigmoid(node1 @ node1.T))
    np.testing.assert_allclose(np.asarray(adj), adj_ref, rtol=1e-5, atol=1e-5)

    time = batch["time"]
    d_w = jnp.concatenate([params["day_emb"][time[:, 0]],
                           params["week_emb"][time[:, 1]]], axis=1)
    tv_ref = np.asarray(jnp.sum(d_w * d_w, axis=1))
    counts_np = np.asarray(ptr[1:] - ptr[:-1])
    ptr_np = np.asarray(ptr)
    mask_np = np.asarray(mask)

    ei_ref, ea_ref = [], []
    for i in range(B):
        e_n = int(counts_np[i])
        m_ref = np.zeros((N, N), dtype=bool)
        m_ref[:e_n, :e_n] = adj_ref[:e_n, :e_n] > 0.5
        np.testing.assert_array_equal(mask_np[i].astype(bool), m_ref)
        rr, cc = np.nonzero(m_ref)
        ei_ref.append(np.stack([rr, cc]).astype(np.int64) + ptr_np[i])
        ea_ref.append(adj_ref[rr, cc] * tv_ref[i])
    ei_ref = np.concatenate(ei_ref, axis=1)
    ea_ref = np.concatenate(ea_ref, axis=0)[:, None]
    np.testing.assert_array_equal(edge_index, ei_ref)
    np.testing.assert_allclose(edge_attr, ea_ref, rtol=1e-5, atol=1e-5)

    print("KERNEL_OK")
</pallas_src>

<mosaic_0001>
module attributes {stable_mosaic.version = 11 : i64} {
  func.func @_fused_adj_edge_kernel(%arg0: i32, %arg1: i32, %arg2: memref<2xi32, #tpu.memory_space<smem>>, %arg3: memref<128x16xf32, #tpu.memory_space<vmem>>, %arg4: memref<64x128xf32, #tpu.memory_space<vmem>>, %arg5: memref<2x64x128xi8, #tpu.memory_space<vmem>>) attributes {dimension_semantics = [#tpu.dimension_semantics<parallel>, #tpu.dimension_semantics<parallel>], iteration_bounds = array<i64: 2, 1>, scalar_prefetch = 0 : i64, scratch_operands = 0 : i64, tpu.core_type = #tpu.core_type<tc>, window_params = [{transform_indices = @transform_0, window_bounds = array<i64: 2>}, {pipeline_mode = #tpu.pipeline_mode<synchronous>, transform_indices = @transform_1, window_bounds = array<i64: 128, 16>}, {transform_indices = @transform_2, window_bounds = array<i64: 64, 128>}, {transform_indices = @transform_3, window_bounds = array<i64: 2, 64, 128>}]} {
    %c64_i32 = arith.constant 64 : i32
    %0 = arith.muli %arg0, %c64_i32 : i32
    %1 = tpu.assume_multiple %0, 64 : i32
    %c128_i32 = arith.constant 128 : i32
    %2 = arith.muli %arg1, %c128_i32 : i32
    %3 = tpu.assume_multiple %2, 128 : i32
    %4 = arith.index_cast %1 : i32 to index
    %c0 = arith.constant 0 : index
    %5 = vector.load %arg3[%4, %c0] : memref<128x16xf32, #tpu.memory_space<vmem>>, vector<64x16xf32>
    %6 = arith.index_cast %3 : i32 to index
    %c0_0 = arith.constant 0 : index
    %7 = vector.load %arg3[%6, %c0_0] : memref<128x16xf32, #tpu.memory_space<vmem>>, vector<128x16xf32>
    %cst = arith.constant dense<0.000000e+00> : vector<64x128xf32>
    %8 = tpu.matmul %5, %7, %cst {dimension_numbers = #tpu.dot_dimension_numbers<[1], [1], [0], [0], [0, 0, 1, 0], [], []>} : vector<64x16xf32>, vector<128x16xf32>, vector<64x128xf32> -> vector<64x128xf32>
    %9 = arith.negf %8 : vector<64x128xf32>
    %10 = math.exp %9 : vector<64x128xf32>
    %cst_1 = arith.constant 1.000000e+00 : f32
    %11 = vector.broadcast %cst_1 : f32 to vector<64x128xf32>
    %12 = arith.addf %11, %10 : vector<64x128xf32>
    %13 = arith.divf %11, %12 : vector<64x128xf32>
    %c0_2 = arith.constant 0 : index
    %c0_3 = arith.constant 0 : index
    %14 = vector.load %arg4[%c0_2, %c0_3] : memref<64x128xf32, #tpu.memory_space<vmem>>, vector<64x128xf32>
    tpu.vector_store %arg4[%c0_2, %c0_3], %13 {strides = array<i32>} : memref<64x128xf32, #tpu.memory_space<vmem>>, vector<64x128xf32>,
    %cst_4 = arith.constant 0.000000e+00 : f32
    %15 = vector.broadcast %cst_4 : f32 to vector<64x128xf32>
    %16 = arith.cmpf ogt, %8, %15 : vector<64x128xf32>
    %c64_i32_5 = arith.constant 64 : i32
    %17 = arith.muli %arg0, %c64_i32_5 : i32
    %18 = tpu.iota {dimensions = array<i32: 0>} : vector<64x1xi32>
    %19 = vector.broadcast %17 : i32 to vector<64x1xi32>
    %20 = arith.addi %19, %18 : vector<64x1xi32>
    %c128_i32_6 = arith.constant 128 : i32
    %21 = arith.muli %arg1, %c128_i32_6 : i32
    %22 = tpu.iota {dimensions = array<i32: 1>} : vector<1x128xi32>
    %23 = vector.broadcast %21 : i32 to vector<1x128xi32>
    %24 = arith.addi %23, %22 : vector<1x128xi32>
    %c0_7 = arith.constant 0 : index
    %25 = memref.load %arg2[%c0_7] : memref<2xi32, #tpu.memory_space<smem>>
    %26 = vector.broadcast %25 : i32 to vector<64x1xi32>
    %27 = arith.cmpi slt, %20, %26 : vector<64x1xi32>
    %28 = vector.broadcast %27 : vector<64x1xi1> to vector<64x128xi1>
    %29 = arith.andi %16, %28 : vector<64x128xi1>
    %30 = vector.broadcast %25 : i32 to vector<1x128xi32>
    %31 = arith.cmpi slt, %24, %30 : vector<1x128xi32>
    %32 = vector.broadcast %31 : vector<1x128xi1> to vector<64x128xi1>
    %33 = arith.andi %29, %32 : vector<64x128xi1>
    %c1 = arith.constant 1 : index
    %34 = memref.load %arg2[%c1] : memref<2xi32, #tpu.memory_space<smem>>
    %35 = vector.broadcast %34 : i32 to vector<64x1xi32>
    %36 = arith.cmpi slt, %20, %35 : vector<64x1xi32>
    %37 = vector.broadcast %36 : vector<64x1xi1> to vector<64x128xi1>
    %38 = arith.andi %16, %37 : vector<64x128xi1>
    %39 = vector.broadcast %34 : i32 to vector<1x128xi32>
    %40 = arith.cmpi slt, %24, %39 : vector<1x128xi32>
    %41 = vector.broadcast %40 : vector<1x128xi1> to vector<64x128xi1>
    %42 = arith.andi %38, %41 : vector<64x128xi1>
    %43 = vector.shape_cast %33 : vector<64x128xi1> to vector<1x64x128xi1>
    %44 = vector.shape_cast %42 : vector<64x128xi1> to vector<1x64x128xi1>
    %45 = tpu.concatenate %43, %44 in 0 : vector<1x64x128xi1>, vector<1x64x128xi1> -> vector<2x64x128xi1>
    %46 = arith.extui %45 : vector<2x64x128xi1> to vector<2x64x128xi8>
    %c0_8 = arith.constant 0 : index
    %c0_9 = arith.constant 0 : index
    %c0_10 = arith.constant 0 : index
    %47 = vector.load %arg5[%c0_8, %c0_9, %c0_10] : memref<2x64x128xi8, #tpu.memory_space<vmem>>, vector<2x64x128xi8>
    tpu.vector_store %arg5[%c0_8, %c0_9, %c0_10], %46 {strides = array<i32>} : memref<2x64x128xi8, #tpu.memory_space<vmem>>, vector<2x64x128xi8>,
    return
  }
  func.func @transform_0(%arg0: i32, %arg1: i32) -> i32 {
    %c0_i32 = arith.constant 0 : i32
    %c0_i32_0 = arith.constant 0 : i32
    return %c0_i32 : i32
  }
  func.func @transform_1(%arg0: i32, %arg1: i32) -> (i32, i32) {
    %c0_i32 = arith.constant 0 : i32
    %c0_i32_0 = arith.constant 0 : i32
    %c0_i32_1 = arith.constant 0 : i32
    return %c0_i32, %c0_i32_0 : i32, i32
  }
  func.func @transform_2(%arg0: i32, %arg1: i32) -> (i32, i32) {
    %c0_i32 = arith.constant 0 : i32
    return %arg0, %arg1 : i32, i32
  }
  func.func @transform_3(%arg0: i32, %arg1: i32) -> (i32, i32, i32) {
    %c0_i32 = arith.constant 0 : i32
    %c0_i32_0 = arith.constant 0 : i32
    return %c0_i32, %arg0, %arg1 : i32, i32, i32
  }
}

</mosaic_0001>

<llo_original>
// kernel: _device_forward.1
$region0: #{_device_forward.1}
  #allocation0 [shape = 'u32[]', space=smem, size = 0x4, offset = 0x4, fixed_abs, tag = 'smem constant byte address 0x4 - core index']
  #allocation1 [shape = 'u32[144,128]{1,0:T(1,128)}', space=vmem, size = 0x12000, scoped, tag = 'internal scratch']
  #allocation8 [shape = 's32[]', space=sflag, size = 0x4, offset = 0, fixed_abs, tag = 'sflag constant byte address 0x0 - dummy sync flag']
  %s0 = inlined_call_operand.vmem [shape: s32[2], index: 0, kind: input, shape index: {}]
  %s1 = inlined_call_operand.vmem [shape: f32[128,16], index: 1, kind: input, shape index: {}]
  %s2 = inlined_call_operand.hbm [shape: f32[128,128], index: 2, kind: output, shape index: {0}]
  %s3 = inlined_call_operand.hbm [shape: s8[2,128,128], index: 3, kind: output, shape index: {1}]
  %4 = xla_tuple %s2, %s3
  %s5 = sld [smem:[#allocation0]]
  $region53: #{_device_forward.1} parent=0
    _
  %s7 = ssub.s32 1, %s5
  %s8 = scalar_select 0, %s7, %s5
  $region1: #{_device_forward.1} parent=0
    #allocation2 [shape = 'u8[512]{0}', space=smem, size = 0x200, scoped, tag = 'input window, operand 0, single buffered']
    #allocation3 [shape = 's32[2]{0}', space=sflag, size = 0x8, scoped, tag = 'scoped memory for _device_forward.1']
    #allocation4 [shape = 's32[2]{0}', space=sflag, size = 0x8, scoped, tag = 'scoped memory for _device_forward.1']
    #allocation5 [shape = 'u8[65536]{0}', space=vmem, size = 0x10000, scoped, tag = 'output window, operand 0']
    #allocation6 [shape = 'u8[32768]{0}', space=vmem, size = 0x8000, scoped, tag = 'output window, operand 1']
    #allocation7 [shape = 's32[2]{0}', space=sflag, size = 0x8, scoped, tag = 'scoped memory for _device_forward.1']
    %9 = vsyncpa [#allocation4], 0
    %10 = vsyncpa [#allocation3], 0
    %s11 = scalar_lea.sflag [#allocation3], 1
    %12 = vsyncpa %s11, 0
    %13 = vsyncpa [#allocation7], 0
    %s14 = scalar_lea.sflag [#allocation7], 1
    %15 = vsyncpa %s14, 0
    loop: start=0, step=1, limit=4
    $region2: #{_device_forward.1} parent=1 // loop_pre_header
      _
    $region3: #{_device_forward.1} parent=1 // loop_header
      %s17 = sphi 0, %s21
      %p18 = scmp.ge.s32.totalorder %s17, 4
      %s24 = sphi 0, %s36
      %s25 = sphi 0, %s32
      %s26 = sphi 0, %s24
      %s27 = sphi 0, %s25
      %s28 = sphi 0, %s26
      %s29 = sphi 0, %s27
      %s37 = sphi 0, %s37
      %s39 = sphi 0, %s37
      %s40 = sphi 0, %s39
      %s54 = sphi 0, %s40
      %s58 = sphi 0, %s58
      %s60 = sphi 0, %s58
      %s61 = sphi 0, %s60
      %s75 = sphi 0, %s61
      %s83 = sphi 0, %s85
      %s86 = sphi 0, %s83
      %s87 = sphi 0, %s86
      %s103 = sphi 0, %s87
      %s111 = sphi 0, %s113
      %s114 = sphi 0, %s111
      %s115 = sphi 0, %s114
      %s131 = sphi 0, %s115
    $region4: #{_device_forward.1} parent=1 // loop_header_branch
      %20 = sbr.rel (%p18) target = $region8
    $region5: #{_device_forward.1} parent=1 // loop_body
      %s22 = ssub.s32 %s17, 1
      %s23 = ssub.s32 %s17, 2
      %s30 = sadd.s32 1, %s25
      %p31 = scmp.ge.s32.totalorder %s30, 1
      %s32 = scalar_select %p31, 0, %s30
      %s33 = sadd.s32 1, %s24
      %s34 = scalar_select %p31, %s33, %s24
      %p35 = scmp.ge.s32.totalorder %s34, 2
      %s36 = scalar_select %p35, 0, %s34
      %s38 = sadd.s32 %s37, 1
      %p41 = scmp.eq.s32.totalorder %s17, 1
      %p42 = scmp.ne.s32.totalorder %s37, %s39
      %p43 = scmp.eq.s32.totalorder %s17, 0
      %p44 = por %p42, %p43
      %p45 = scmp.ne.s32.totalorder %s37, %s39
      %p46 = scmp.eq.s32.totalorder %s22, 1
      %p47 = por %p45, %p46
      %p48 = scmp.ne.s32.totalorder %s39, %s40
      %p49 = scmp.eq.s32.totalorder %s22, 0
      %p50 = por %p48, %p49
      %p51 = scmp.ne.s32.totalorder %s39, %s40
      %p52 = scmp.eq.s32.totalorder %s23, 1
      %p53 = por %p51, %p52
      %p55 = scmp.ne.s32.totalorder %s40, %s54
      %p56 = scmp.eq.s32.totalorder %s23, 0
      %p57 = por %p55, %p56
      %s59 = sadd.s32 %s58, 1
      %p62 = scmp.eq.s32.totalorder %s17, 1
      %p63 = scmp.ne.s32.totalorder %s58, %s60
      %p64 = scmp.eq.s32.totalorder %s17, 0
      %p65 = por %p63, %p64
      %p66 = scmp.ne.s32.totalorder %s58, %s60
      %p67 = scmp.eq.s32.totalorder %s22, 1
      %p68 = por %p66, %p67
      %p69 = scmp.ne.s32.totalorder %s60, %s61
      %p70 = scmp.eq.s32.totalorder %s22, 0
      %p71 = por %p69, %p70
      %p72 = scmp.ne.s32.totalorder %s60, %s61
      %p73 = scmp.eq.s32.totalorder %s23, 1
      %p74 = por %p72, %p73
      %p76 = scmp.ne.s32.totalorder %s61, %s75
      %p77 = scmp.eq.s32.totalorder %s23, 0
      %p78 = por %p76, %p77
      %s79 = ssub.s32 %s24, %s36
      %s80 = ssub.s32 %s25, %s32
      %s81 = sor.u32 %s79, %s80
      %p82 = scmp.eq.s32.totalorder %s81, 0
      %s84 = sadd.s32 %s83, 1
      %s85 = scalar_select %p82, %s83, %s84
      %p88 = pneg %p82
      %p89 = scmp.eq.s32.totalorder %s17, 1
      %p90 = por %p88, %p89
      %p91 = scmp.ne.s32.totalorder %s83, %s86
      %p92 = scmp.eq.s32.totalorder %s17, 0
      %p93 = por %p91, %p92
      %p94 = scmp.ne.s32.totalorder %s83, %s86
      %p95 = scmp.eq.s32.totalorder %s22, 1
      %p96 = por %p94, %p95
      %p97 = scmp.ne.s32.totalorder %s86, %s87
      %p98 = scmp.eq.s32.totalorder %s22, 0
      %p99 = por %p97, %p98
      %p100 = scmp.ne.s32.totalorder %s86, %s87
      %p101 = scmp.eq.s32.totalorder %s23, 1
      %p102 = por %p100, %p101
      %p104 = scmp.ne.s32.totalorder %s87, %s103
      %p105 = scmp.eq.s32.totalorder %s23, 0
      %p106 = por %p104, %p105
      %s107 = ssub.s32 %s24, %s36
      %s108 = ssub.s32 %s25, %s32
      %s109 = sor.u32 %s107, %s108
      %p110 = scmp.eq.s32.totalorder %s109, 0
      %s112 = sadd.s32 %s111, 1
      %s113 = scalar_select %p110, %s111, %s112
      %p116 = pneg %p110
      %p117 = scmp.eq.s32.totalorder %s17, 1
      %p118 = por %p116, %p117
      %p119 = scmp.ne.s32.totalorder %s111, %s114
      %p120 = scmp.eq.s32.totalorder %s17, 0
      %p121 = por %p119, %p120
      %p122 = scmp.ne.s32.totalorder %s111, %s114
      %p123 = scmp.eq.s32.totalorder %s22, 1
      %p124 = por %p122, %p123
      %p125 = scmp.ne.s32.totalorder %s114, %s115
      %p126 = scmp.eq.s32.totalorder %s22, 0
      %p127 = por %p125, %p126
      %p128 = scmp.ne.s32.totalorder %s114, %s115
      %p129 = scmp.eq.s32.totalorder %s23, 1
      %p130 = por %p128, %p129
      %p132 = scmp.ne.s32.totalorder %s115, %s131
      %p133 = scmp.eq.s32.totalorder %s23, 0
      %p134 = por %p132, %p133
      %p135 = scmp.le.s32.totalorder 1, %s17
      %p136 = scmp.lt.s32.totalorder %s17, 3
      %p137 = pnand %p135, %p136
      %p138 = pneg %p137
      // Predicated region
      $region9: #{_device_forward.1} parent=5 // pred_check
        _
      $region10: #{_device_forward.1} parent=5 // pred_check_branch
        %140 = sbr.rel (%p137) target = $region12
      $region11: #{_device_forward.1} parent=5 // pred_region
        %s141 = ssub.s32 %s17, 1
        // Predicated region
        $region13: #{_device_forward.1} parent=11 // pred_check
          %p142 = pneg %p50
        $region14: #{_device_forward.1} parent=11 // pred_check_branch
          %144 = sbr.rel (%p142) target = $region16
        $region15: #{_device_forward.1} parent=11 // pred_region
          %s146 = ssub.s32 16, 16
          %147 = vsyncadd [#allocation4], %s146
          %s149 = sshll.u32 %s0, 4
          %s150 = int_to_ptr.vmem [resolvable:$true] %s149
          %152 = dma.vmem_to_smem %s150, 16, [#allocation2], [#allocation4]
        $region16: #{_device_forward.1} parent=11 // pred_fallthru
          _
        // Predicated region
        $region17: #{_device_forward.1} parent=11 // pred_check
          %p153 = pneg %p71
        $region18: #{_device_forward.1} parent=11 // pred_check_branch
          %155 = sbr.rel (%p153) target = $region20
        $region19: #{_device_forward.1} parent=11 // pred_region
          _
        $region20: #{_device_forward.1} parent=11 // pred_fallthru
          _
      $region12: #{_device_forward.1} parent=5 // pred_fallthru
        _
      %p156 = scmp.lt.s32.totalorder %s17, 2
      // Predicated region
      $region21: #{_device_forward.1} parent=5 // pred_check
        %p157 = pneg %p156
      $region22: #{_device_forward.1} parent=5 // pred_check_branch
        %159 = sbr.rel (%p157) target = $region24
      $region23: #{_device_forward.1} parent=5 // pred_region
        _
      $region24: #{_device_forward.1} parent=5 // pred_fallthru
        _
      %p160 = scmp.le.s32.totalorder 1, %s17
      %p161 = scmp.lt.s32.totalorder %s17, 3
      %p162 = pnand %p160, %p161
      %p163 = pneg %p162
      // Predicated region
      $region25: #{_device_forward.1} parent=5 // pred_check
        _
      $region26: #{_device_forward.1} parent=5 // pred_check_branch
        %165 = sbr.rel (%p162) target = $region28
      $region27: #{_device_forward.1} parent=5 // pred_region
        %s166 = ssub.s32 %s17, 1
        // Predicated region
        $region29: #{_device_forward.1} parent=27 // pred_check
          %p167 = pneg %p50
        $region30: #{_device_forward.1} parent=27 // pred_check_branch
          %169 = sbr.rel (%p167) target = $region32
        $region31: #{_device_forward.1} parent=27 // pred_region
          %170 = dma.done [#allocation4], 16
        $region32: #{_device_forward.1} parent=27 // pred_fallthru
          _
        %171 = sfence
        %p172 = pneg %p50
        %p173 = pneg %p47
        %p174 = pneg %p71
        %p175 = pneg %p68
        %p176 = pneg %p99
        %p177 = pneg %p96
        %s178 = sand.u32 %s86, 1
        %s179 = scalar_lea.sflag [#allocation3], %s178
        %s180 = sand.u32 %s86, 1
        %s181 = smul.addr %s180, 64
        %s182 = scalar_lea.vmem [#allocation5], %s181
        %p183 = pneg %p127
        %p184 = pneg %p124
        %s185 = sand.u32 %s114, 1
        %s186 = scalar_lea.sflag [#allocation7], %s185
        %s187 = sand.u32 %s114, 1
        %s188 = smul.addr %s187, 32
        %s189 = scalar_lea.vmem [#allocation6], %s188
        %s190 = smul.u32 8, %s26
        %s191 = smul.u32 2, %s26
        %s194 = smul.u32 %s26, 64
        %s195 = smul.u32 %s27, 128
        %s196 = scalar_lea.vmem %s1, %s194
        %v197 = vld [vmem:[%s196] sm:$0xff]
        %v198 = vld [vmem:[%s196 + $0x8] sm:$0xff]
        %v199 = vld [vmem:[%s196 + $0x10] sm:$0xff]
        %v200 = vld [vmem:[%s196 + $0x18] sm:$0xff]
        %v201 = vld [vmem:[%s196 + $0x20] sm:$0xff]
        %v202 = vld [vmem:[%s196 + $0x28] sm:$0xff]
        %v203 = vld [vmem:[%s196 + $0x30] sm:$0xff]
        %v204 = vld [vmem:[%s196 + $0x38] sm:$0xff]
        %s205 = scalar_lea.vmem %s1, %s195
        %v206 = vld [vmem:[%s205] sm:$0xff]
        %v207 = vld [vmem:[%s205 + $0x8] sm:$0xff]
        %v208 = vld [vmem:[%s205 + $0x10] sm:$0xff]
        %v209 = vld [vmem:[%s205 + $0x18] sm:$0xff]
        %v210 = vld [vmem:[%s205 + $0x20] sm:$0xff]
        %v211 = vld [vmem:[%s205 + $0x28] sm:$0xff]
        %v212 = vld [vmem:[%s205 + $0x30] sm:$0xff]
        %v213 = vld [vmem:[%s205 + $0x38] sm:$0xff]
        %v214 = vld [vmem:[%s205 + $0x40] sm:$0xff]
        %v215 = vld [vmem:[%s205 + $0x48] sm:$0xff]
        %v216 = vld [vmem:[%s205 + $0x50] sm:$0xff]
        %v217 = vld [vmem:[%s205 + $0x58] sm:$0xff]
        %v218 = vld [vmem:[%s205 + $0x60] sm:$0xff]
        %v219 = vld [vmem:[%s205 + $0x68] sm:$0xff]
        %v220 = vld [vmem:[%s205 + $0x70] sm:$0xff]
        %v221 = vld [vmem:[%s205 + $0x78] sm:$0xff]
        %vm222 = vcmask 130048
        %v224 = vsel %vm222, %v197, 0
        %v227 = vsel %vm222, %v198, 0
        %v230 = vsel %vm222, %v199, 0
        %v233 = vsel %vm222, %v200, 0
        %v236 = vsel %vm222, %v201, 0
        %v239 = vsel %vm222, %v202, 0
        %v242 = vsel %vm222, %v203, 0
        %v245 = vsel %vm222, %v204, 0
        %v248 = vsel %vm222, %v206, 0
        %v251 = vsel %vm222, %v207, 0
        %v254 = vsel %vm222, %v208, 0
        %v257 = vsel %vm222, %v209, 0
        %v260 = vsel %vm222, %v210, 0
        %v263 = vsel %vm222, %v211, 0
        %v266 = vsel %vm222, %v212, 0
        %v269 = vsel %vm222, %v213, 0
        %v272 = vsel %vm222, %v214, 0
        %v275 = vsel %vm222, %v215, 0
        %v278 = vsel %vm222, %v216, 0
        %v281 = vsel %vm222, %v217, 0
        %v284 = vsel %vm222, %v218, 0
        %v287 = vsel %vm222, %v219, 0
        %v290 = vsel %vm222, %v220, 0
        %v293 = vsel %vm222, %v221, 0
        %295 = vmatprep.subr.mxu0 0.0
        %296 = vmatpush1.xpose.msra.mxu0 %v248
        %297 = vmatprep.subr.mxu0 0.0
        %298 = vmatpush1.xpose.msra.mxu0 %v251
        %299 = vmatprep.subr.mxu0 0.0
        %300 = vmatpush1.xpose.msra.mxu0 %v254
        %301 = vmatprep.subr.mxu0 0.0
        %302 = vmatpush1.xpose.msra.mxu0 %v257
        %303 = vmatprep.subr.mxu0 0.0
        %304 = vmatpush1.xpose.msra.mxu0 %v260
        %305 = vmatprep.subr.mxu0 0.0
        %306 = vmatpush1.xpose.msra.mxu0 %v263
        %307 = vmatprep.subr.mxu0 0.0
        %308 = vmatpush1.xpose.msra.mxu0 %v266
        %309 = vmatprep.subr.mxu0 0.0
        %310 = vmatpush1.xpose.msra.mxu0 %v269
        %311 = vmatprep.subr.mxu0 0.0
        %312 = vmatpush1.xpose.msra.mxu0 %v272
        %313 = vmatprep.subr.mxu0 0.0
        %314 = vmatpush1.xpose.msra.mxu0 %v275
        %315 = vmatprep.subr.mxu0 0.0
        %316 = vmatpush1.xpose.msra.mxu0 %v278
        %317 = vmatprep.subr.mxu0 0.0
        %318 = vmatpush1.xpose.msra.mxu0 %v281
        %319 = vmatprep.subr.mxu0 0.0
        %320 = vmatpush1.xpose.msra.mxu0 %v284
        %321 = vmatprep.subr.mxu0 0.0
        %322 = vmatpush1.xpose.msra.mxu0 %v287
        %323 = vmatprep.subr.mxu0 0.0
        %324 = vmatpush1.xpose.msra.mxu0 %v290
        %325 = vmatprep.subr.mxu0 0.0
        %326 = vmatpush1.xpose.msra.mxu0 %v293
        %327 = vmatprep.subr.mxu0 0.0
        %328 = vmatpush1.xpose.msra.mxu0 0.0
        %329 = vmatprep.subr.mxu0 0.0
        %330 = vmatpush1.xpose.msra.mxu0 0.0
        %331 = vmatprep.subr.mxu0 0.0
        %332 = vmatpush1.xpose.msra.mxu0 0.0
        %333 = vmatprep.subr.mxu0 0.0
        %334 = vmatpush1.xpose.msra.mxu0 0.0
        %335 = vmatprep.subr.mxu0 0.0
        %336 = vmatpush1.xpose.msra.mxu0 0.0
        %337 = vmatprep.subr.mxu0 0.0
        %338 = vmatpush1.xpose.msra.mxu0 0.0
        %339 = vmatprep.subr.mxu0 0.0
        %340 = vmatpush1.xpose.msra.mxu0 0.0
        %341 = vmatprep.subr.mxu0 0.0
        %342 = vmatpush1.xpose.msra.mxu0 0.0
        %343 = vmatprep.subr.mxu0 0.0
        %344 = vmatpush1.xpose.msra.mxu0 0.0
        %345 = vmatprep.subr.mxu0 0.0
        %346 = vmatpush1.xpose.msra.mxu0 0.0
        %347 = vmatprep.subr.mxu0 0.0
        %348 = vmatpush1.xpose.msra.mxu0 0.0
        %349 = vmatprep.subr.mxu0 0.0
        %350 = vmatpush1.xpose.msra.mxu0 0.0
        %351 = vmatprep.subr.mxu0 0.0
        %352 = vmatpush1.xpose.msra.mxu0 0.0
        %353 = vmatprep.subr.mxu0 0.0
        %354 = vmatpush1.xpose.msra.mxu0 0.0
        %355 = vmatprep.subr.mxu0 0.0
        %356 = vmatpush1.xpose.msra.mxu0 0.0
        %357 = vmatprep.subr.mxu0 0.0
        %358 = vmatpush1.xpose.msra.mxu0 0.0
        %359 = vmatprep.mubr.f32.mxu0 0.0
        %360 = vmatmul.mubr.f32.gmra.mrb[0].mxu0 %v224
        %v361 = vpop.f32.mrb[0].mxu0
        %v362 = vadd.f32 0.0, %v361
        %v363 = vpop.f32.mrb[0].mxu0
        %364 = vmatprep.mubr.f32.mxu0 0.0
        %365 = vmatmul.mubr.f32.gmra.mrb[0].mxu0 %v227
        %v366 = vpop.f32.mrb[0].mxu0
        %v367 = vadd.f32 0.0, %v366
        %v368 = vpop.f32.mrb[0].mxu0
        %369 = vmatprep.mubr.f32.mxu0 0.0
        %370 = vmatmul.mubr.f32.gmra.mrb[0].mxu0 %v230
        %v371 = vpop.f32.mrb[0].mxu0
        %v372 = vadd.f32 0.0, %v371
        %v373 = vpop.f32.mrb[0].mxu0
        %374 = vmatprep.mubr.f32.mxu0 0.0
        %375 = vmatmul.mubr.f32.gmra.mrb[0].mxu0 %v233
        %v376 = vpop.f32.mrb[0].mxu0
        %v377 = vadd.f32 0.0, %v376
        %v378 = vpop.f32.mrb[0].mxu0
        %379 = vmatprep.mubr.f32.mxu0 0.0
        %380 = vmatmul.mubr.f32.gmra.mrb[0].mxu0 %v236
        %v381 = vpop.f32.mrb[0].mxu0
        %v382 = vadd.f32 0.0, %v381
        %v383 = vpop.f32.mrb[0].mxu0
        %384 = vmatprep.mubr.f32.mxu0 0.0
        %385 = vmatmul.mubr.f32.gmra.mrb[0].mxu0 %v239
        %v386 = vpop.f32.mrb[0].mxu0
        %v387 = vadd.f32 0.0, %v386
        %v388 = vpop.f32.mrb[0].mxu0
        %389 = vmatprep.mubr.f32.mxu0 0.0
        %390 = vmatmul.mubr.f32.gmra.mrb[0].mxu0 %v242
        %v391 = vpop.f32.mrb[0].mxu0
        %v392 = vadd.f32 0.0, %v391
        %v393 = vpop.f32.mrb[0].mxu0
        %394 = vmatprep.mubr.f32.mxu0 0.0
        %395 = vmatmul.mubr.f32.gmra.mrb[0].mxu0 %v245
        %v396 = vpop.f32.mrb[0].mxu0
        %v397 = vadd.f32 0.0, %v396
        %v398 = vpop.f32.mrb[0].mxu0
        %399 = vdwg.mxu0
        %v400 = vxor.u32 %v362, 2147483648
        %v401 = vxor.u32 %v367, 2147483648
        %v402 = vxor.u32 %v372, 2147483648
        %v403 = vxor.u32 %v377, 2147483648
        %v404 = vxor.u32 %v382, 2147483648
        %v405 = vxor.u32 %v387, 2147483648
        %v406 = vxor.u32 %v392, 2147483648
        %v407 = vxor.u32 %v397, 2147483648
        %v408 = vmul.f32 %v400, 1.442695
        %v409 = vpow.pop %v408
        %v410 = vmul.f32 %v401, 1.442695
        %v411 = vpow.pop %v410
        %v412 = vmul.f32 %v402, 1.442695
        %v413 = vpow.pop %v412
        %v414 = vmul.f32 %v403, 1.442695
        %v415 = vpow.pop %v414
        %v416 = vmul.f32 %v404, 1.442695
        %v417 = vpow.pop %v416
        %v418 = vmul.f32 %v405, 1.442695
        %v419 = vpow.pop %v418
        %v420 = vmul.f32 %v406, 1.442695
        %v421 = vpow.pop %v420
        %v422 = vmul.f32 %v407, 1.442695
        %v423 = vpow.pop %v422
        %v424 = vadd.f32 %v409, 1.0
        %v425 = vadd.f32 %v411, 1.0
        %v426 = vadd.f32 %v413, 1.0
        %v427 = vadd.f32 %v415, 1.0
        %v428 = vadd.f32 %v417, 1.0
        %v429 = vadd.f32 %v419, 1.0
        %v430 = vadd.f32 %v421, 1.0
        %v431 = vadd.f32 %v423, 1.0
        %v432 = vrcp.pop %v424
        %v433 = vmul.f32 1.0, %v432
        %v434 = vrcp.pop %v425
        %v435 = vmul.f32 1.0, %v434
        %v436 = vrcp.pop %v426
        %v437 = vmul.f32 1.0, %v436
        %v438 = vrcp.pop %v427
        %v439 = vmul.f32 1.0, %v438
        %v440 = vrcp.pop %v428
        %v441 = vmul.f32 1.0, %v440
        %v442 = vrcp.pop %v429
        %v443 = vmul.f32 1.0, %v442
        %v444 = vrcp.pop %v430
        %v445 = vmul.f32 1.0, %v444
        %v446 = vrcp.pop %v431
        %v447 = vmul.f32 1.0, %v446
        %448 = vst [vmem:[%s182] sm:$0xff] %v433
        %449 = vst [vmem:[%s182 + $0x8] sm:$0xff] %v435
        %450 = vst [vmem:[%s182 + $0x10] sm:$0xff] %v437
        %451 = vst [vmem:[%s182 + $0x18] sm:$0xff] %v439
        %452 = vst [vmem:[%s182 + $0x20] sm:$0xff] %v441
        %453 = vst [vmem:[%s182 + $0x28] sm:$0xff] %v443
        %454 = vst [vmem:[%s182 + $0x30] sm:$0xff] %v445
        %455 = vst [vmem:[%s182 + $0x38] sm:$0xff] %v447
        %vm456 = vcmp.gt.f32.partialorder %v362, 0.0
        %vm457 = vcmp.gt.f32.partialorder %v367, 0.0
        %vm458 = vcmp.gt.f32.partialorder %v372, 0.0
        %vm459 = vcmp.gt.f32.partialorder %v377, 0.0
        %vm460 = vcmp.gt.f32.partialorder %v382, 0.0
        %vm461 = vcmp.gt.f32.partialorder %v387, 0.0
        %vm462 = vcmp.gt.f32.partialorder %v392, 0.0
        %vm463 = vcmp.gt.f32.partialorder %v397, 0.0
        %v464 = vlaneseq
        %v465 = vshrl.u32 %v464, 7
        %v466 = vadd.s32 %v465, 8
        %v467 = vadd.s32 %v465, 16
        %v468 = vadd.s32 %v465, 24
        %v469 = vadd.s32 %v465, 32
        %v470 = vadd.s32 %v465, 40
        %v471 = vadd.s32 %v465, 48
        %v472 = vadd.s32 %v465, 56
        %v473 = vstv %s194
        %v474 = vadd.s32 %v473, %v465
        %v475 = vadd.s32 %v473, %v466
        %v476 = vadd.s32 %v473, %v467
        %v477 = vadd.s32 %v473, %v468
        %v478 = vadd.s32 %v473, %v469
        %v479 = vadd.s32 %v473, %v470
        %v480 = vadd.s32 %v473, %v471
        %v481 = vadd.s32 %v473, %v472
        %v482 = vlaneseq
        %v483 = vand.u32 %v482, 127
        %v484 = vstv %s195
        %v485 = vadd.s32 %v484, %v483
        %s486 = sld [smem:[#allocation2]]
        %v487 = vstv %s486
        %vm488 = vcmp.lt.s32.totalorder %v474, %v487
        %vm489 = vcmp.lt.s32.totalorder %v475, %v487
        %vm490 = vcmp.lt.s32.totalorder %v476, %v487
        %vm491 = vcmp.lt.s32.totalorder %v477, %v487
        %vm492 = vcmp.lt.s32.totalorder %v478, %v487
        %vm493 = vcmp.lt.s32.totalorder %v479, %v487
        %vm494 = vcmp.lt.s32.totalorder %v480, %v487
        %vm495 = vcmp.lt.s32.totalorder %v481, %v487
        %v496 = vsel %vm488, 1, 0
        %v497 = vsel %vm489, 1, 0
        %v498 = vsel %vm490, 1, 0
        %v499 = vsel %vm491, 1, 0
        %v500 = vsel %vm492, 1, 0
        %v501 = vsel %vm493, 1, 0
        %v502 = vsel %vm494, 1, 0
        %v503 = vsel %vm495, 1, 0
        %vm504 = vcmp.eq.s32.totalorder %v496, 1
        %vm505 = vcmp.eq.s32.totalorder %v497, 1
        %vm506 = vcmp.eq.s32.totalorder %v498, 1
        %vm507 = vcmp.eq.s32.totalorder %v499, 1
        %vm508 = vcmp.eq.s32.totalorder %v500, 1
        %vm509 = vcmp.eq.s32.totalorder %v501, 1
        %vm510 = vcmp.eq.s32.totalorder %v502, 1
        %vm511 = vcmp.eq.s32.totalorder %v503, 1
        %vm512 = vmand %vm456, %vm504
        %vm513 = vmand %vm457, %vm505
        %vm514 = vmand %vm458, %vm506
        %vm515 = vmand %vm459, %vm507
        %vm516 = vmand %vm460, %vm508
        %vm517 = vmand %vm461, %vm509
        %vm518 = vmand %vm462, %vm510
        %vm519 = vmand %vm463, %vm511
        %vm520 = vcmp.lt.s32.totalorder %v485, %v487
        %v521 = vsel %vm520, 1, 0
        %vm522 = vcmp.eq.s32.totalorder %v521, 1
        %vm523 = vmand %vm512, %vm522
        %vm524 = vmand %vm513, %vm522
        %vm525 = vmand %vm514, %vm522
        %vm526 = vmand %vm515, %vm522
        %vm527 = vmand %vm516, %vm522
        %vm528 = vmand %vm517, %vm522
        %vm529 = vmand %vm518, %vm522
        %vm530 = vmand %vm519, %vm522
        %s531 = sld [smem:[#allocation2 + $0x1]]
        %v532 = vstv %s531
        %vm533 = vcmp.lt.s32.totalorder %v474, %v532
        %vm534 = vcmp.lt.s32.totalorder %v475, %v532
        %vm535 = vcmp.lt.s32.totalorder %v476, %v532
        %vm536 = vcmp.lt.s32.totalorder %v477, %v532
        %vm537 = vcmp.lt.s32.totalorder %v478, %v532
        %vm538 = vcmp.lt.s32.totalorder %v479, %v532
        %vm539 = vcmp.lt.s32.totalorder %v480, %v532
        %vm540 = vcmp.lt.s32.totalorder %v481, %v532
        %v541 = vsel %vm533, 1, 0
        %v542 = vsel %vm534, 1, 0
        %v543 = vsel %vm535, 1, 0
        %v544 = vsel %vm536, 1, 0
        %v545 = vsel %vm537, 1, 0
        %v546 = vsel %vm538, 1, 0
        %v547 = vsel %vm539, 1, 0
        %v548 = vsel %vm540, 1, 0
        %vm549 = vcmp.eq.s32.totalorder %v541, 1
        %vm550 = vcmp.eq.s32.totalorder %v542, 1
        %vm551 = vcmp.eq.s32.totalorder %v543, 1
        %vm552 = vcmp.eq.s32.totalorder %v544, 1
        %vm553 = vcmp.eq.s32.totalorder %v545, 1
        %vm554 = vcmp.eq.s32.totalorder %v546, 1
        %vm555 = vcmp.eq.s32.totalorder %v547, 1
        %vm556 = vcmp.eq.s32.totalorder %v548, 1
        %vm557 = vmand %vm456, %vm549
        %vm558 = vmand %vm457, %vm550
        %vm559 = vmand %vm458, %vm551
        %vm560 = vmand %vm459, %vm552
        %vm561 = vmand %vm460, %vm553
        %vm562 = vmand %vm461, %vm554
        %vm563 = vmand %vm462, %vm555
        %vm564 = vmand %vm463, %vm556
        %vm565 = vcmp.lt.s32.totalorder %v485, %v532
        %v566 = vsel %vm565, 1, 0
        %vm567 = vcmp.eq.s32.totalorder %v566, 1
        %vm568 = vmand %vm557, %vm567
        %vm569 = vmand %vm558, %vm567
        %vm570 = vmand %vm559, %vm567
        %vm571 = vmand %vm560, %vm567
        %vm572 = vmand %vm561, %vm567
        %vm573 = vmand %vm562, %vm567
        %vm574 = vmand %vm563, %vm567
        %vm575 = vmand %vm564, %vm567
        %vm576 = vmpackc.low %vm524, %vm523
        %vm577 = vmpackc.low %vm526, %vm525
        %vm578 = vmpackc.even %vm577, %vm576
        %vm579 = vmpackc.low %vm528, %vm527
        %vm580 = vmpackc.low %vm530, %vm529
        %vm581 = vmpackc.even %vm580, %vm579
        %vm582 = vmpackc.low %vm569, %vm568
        %vm583 = vmpackc.low %vm571, %vm570
        %vm584 = vmpackc.even %vm583, %vm582
        %vm585 = vmpackc.low %vm573, %vm572
        %vm586 = vmpackc.low %vm575, %vm574
        %vm587 = vmpackc.even %vm586, %vm585
        %v588 = vsel %vm578, 16843009, 0
        %v589 = vsel %vm581, 16843009, 0
        %v590 = vsel %vm584, 16843009, 0
        %v591 = vsel %vm587, 16843009, 0
        %592 = vst [vmem:[%s189] sm:$0xff] %v588
        %593 = vst [vmem:[%s189 + $0x8] sm:$0xff] %v589
        %594 = vst [vmem:[%s189 + $0x10] sm:$0xff] %v590
        %595 = vst [vmem:[%s189 + $0x18] sm:$0xff] %v591
        %s596 = sand.u32 %s86, 1
        %s597 = scalar_lea.sflag [#allocation3], %s596
        %s598 = sand.u32 %s86, 1
        %s599 = smul.addr %s598, 64
        %s600 = scalar_lea.vmem [#allocation5], %s599
        %s601 = sand.u32 %s114, 1
        %s602 = scalar_lea.sflag [#allocation7], %s601
        %s603 = sand.u32 %s114, 1
        %s604 = smul.addr %s603, 32
        %s605 = scalar_lea.vmem [#allocation6], %s604
        // Predicated region
        $region33: #{_device_forward.1} parent=27 // pred_check
          %p606 = pneg %p96
        $region34: #{_device_forward.1} parent=27 // pred_check_branch
          %608 = sbr.rel (%p606) target = $region36
        $region35: #{_device_forward.1} parent=27 // pred_region
          %s609 = smul.u32 8, %s26
          %s611 = ssub.s32 1024, 1024
          %612 = vsyncadd %s597, %s611
          %s613 = sadd.s32 %s27, %s609
          %s614 = smul.addr %s613, 128
          %s615 = scalar_lea.hbm %s2, %s614
          %s616 = sshll.u32 %s600, 4
          %s617 = int_to_ptr.vmem [resolvable:$true] %s616
          %622 = dma.vmem_to_hbm [thread:$0]  %s617, 1024, %s615, %s597, 128, 128, 8
        $region36: #{_device_forward.1} parent=27 // pred_fallthru
          _
        // Predicated region
        $region37: #{_device_forward.1} parent=27 // pred_check
          %p623 = pneg %p124
        $region38: #{_device_forward.1} parent=27 // pred_check_branch
          %625 = sbr.rel (%p623) target = $region40
        $region39: #{_device_forward.1} parent=27 // pred_region
          #allocation9 [shape = 'u32[6]{0}', space=smem, size = 0x18, scoped, tag = 'DMA stride descriptor']
          %s626 = smul.u32 2, %s26
          %s628 = ssub.s32 512, 512
          %629 = vsyncadd %s602, %s628
          %s630 = sadd.s32 %s27, %s626
          %s631 = smul.addr %s630, 128
          %s632 = scalar_lea.hbm %s3, %s631
          %s634 = sshll.u32 1, 14
          %s635 = sxor.u32 4294967295, %s634
          %s638 = sshll.u32 7, 18
          %s639 = sxor.u32 4294967295, %s638
          %s640 = sand.u32 0, %s639
          %s642 = sor.u32 %s640, 0
          %s644 = sshll.u32 3, 24
          %s645 = sxor.u32 4294967295, %s644
          %s646 = sand.u32 %s642, %s645
          %s648 = sor.u32 %s646, 0
          %s649 = sshll.u32 %s605, 4
          %s650 = int_to_ptr.vmem [resolvable:$true] %s649
          %656 = sst [smem:[#allocation9]] 256
          %s657 = scalar_lea.smem [#allocation9], 1
          %658 = sst [smem:[%s657]] 512
          %s659 = scalar_lea.smem [#allocation9], 2
          %660 = sst [smem:[%s659]] 2
          %s661 = scalar_lea.smem [#allocation9], 3
          %662 = sst [smem:[%s661]] 128
          %s663 = scalar_lea.smem [#allocation9], 4
          %664 = sst [smem:[%s663]] 128
          %s665 = scalar_lea.smem [#allocation9], 5
          %666 = sst [smem:[%s665]] 8
          %668 = dma.general %s650, 512, %s632, %s602, [#allocation8], [#allocation9], %s648, 0
        $region40: #{_device_forward.1} parent=27 // pred_fallthru
          _
      $region28: #{_device_forward.1} parent=5 // pred_fallthru
        _
      %p669 = scmp.le.s32.totalorder 2, %s17
      // Predicated region
      $region41: #{_device_forward.1} parent=5 // pred_check
        %p670 = pneg %p669
      $region42: #{_device_forward.1} parent=5 // pred_check_branch
        %672 = sbr.rel (%p670) target = $region44
      $region43: #{_device_forward.1} parent=5 // pred_region
        %s673 = ssub.s32 %s17, 2
        // Predicated region
        $region45: #{_device_forward.1} parent=43 // pred_check
          %p674 = pneg %p102
        $region46: #{_device_forward.1} parent=43 // pred_check_branch
          %676 = sbr.rel (%p674) target = $region48
        $region47: #{_device_forward.1} parent=43 // pred_region
          %s677 = sand.u32 %s87, 1
          %s678 = scalar_lea.sflag [#allocation3], %s677
          %s679 = sand.u32 %s87, 1
          %s680 = smul.addr %s679, 64
          %s681 = scalar_lea.vmem [#allocation5], %s680
          %682 = dma.done %s678, 1024
        $region48: #{_device_forward.1} parent=43 // pred_fallthru
          _
        // Predicated region
        $region49: #{_device_forward.1} parent=43 // pred_check
          %p683 = pneg %p130
        $region50: #{_device_forward.1} parent=43 // pred_check_branch
          %685 = sbr.rel (%p683) target = $region52
        $region51: #{_device_forward.1} parent=43 // pred_region
          %s686 = sand.u32 %s115, 1
          %s687 = scalar_lea.sflag [#allocation7], %s686
          %s688 = sand.u32 %s115, 1
          %s689 = smul.addr %s688, 32
          %s690 = scalar_lea.vmem [#allocation6], %s689
          %691 = dma.done %s687, 512
        $region52: #{_device_forward.1} parent=43 // pred_fallthru
          _
      $region44: #{_device_forward.1} parent=5 // pred_fallthru
        _
    $region6: #{_device_forward.1} parent=1 // loop_footer
      %s21 = sadd.s32 1, %s17
    $region7: #{_device_forward.1} parent=1 // loop_footer_branch
      %16 = sbr.rel target = $region3
    $region8: #{_device_forward.1} parent=1 // loop_exit
      _
    %692 = vsyncpa [#allocation3], 1
    %s693 = scalar_lea.sflag [#allocation3], 1
    %694 = vsyncpa %s693, 1
    %695 = vsyncpa [#allocation7], 1
    %s696 = scalar_lea.sflag [#allocation7], 1
    %697 = vsyncpa %s696, 1
    %698 = vsyncpa [#allocation4], 1
    %s699 = scalar_lea.sflag [#allocation4], 1
    %700 = vsyncpa %s699, 1

</llo_original>
